<compile_context>
chip_gen: v5e
topology: v5e:2x2
jax: 0.10.0
libtpu: 0.0.40
codegen_flags: <defaults>
</compile_context>

<pallas_src>
import jax
import jax.numpy as jnp
from jax import lax
from jax.experimental import pallas as pl
from jax.experimental.pallas import tpu as pltpu

_LANE = 128
_SUBLANE = 8


def _round_up(x, m):
    return ((x + m - 1) // m) * m


def _critic_kernel(x_ref, w1t_ref, b1_ref, w2_ref, b2_ref, o_ref):
    """One batch tile; batch is on the 128-lane axis of the result.

    x_ref  : [TB, S]  natural-layout input tile (pipelined)
    w1t_ref: [H, S]   W1ᵀ (VMEM resident)
    b1_ref : [H, 1]   (VMEM resident)
    w2_ref : [H, 1]   (VMEM resident)
    b2_ref : [1, 1]   scalar in SMEM
    o_ref  : [1, TB]  lane-dense output slab row
    """
    # hidden = relu(W1ᵀ @ xᵀ + b1) -> [H, TB]; contraction on S of both operands,
    # so no wrapper-side transpose of x is needed (same pattern as q @ kᵀ).
    h = lax.dot_general(
        w1t_ref[...], x_ref[...],
        dimension_numbers=(((1,), (1,)), ((), ())),
        preferred_element_type=jnp.float32,
    )
    h = jnp.maximum(h + b1_ref[...], 0.0)           # [H,1] broadcasts over lanes
    # value = Σ_H (h * w2) + b2 -> [1, TB]  (VPU multiply + cross-sublane reduce;
    # the N=1 second-layer matmul is deliberately kept off the MXU).
    v = jnp.sum(h * w2_ref[...], axis=0, keepdims=True)
    o_ref[...] = v + b2_ref[0, 0]


def _pick_tiling(B, S, H, tb_max, vmem_tile_budget):
    """Choose (TB, num_tiles, B_pad, bytes_per_col).

    TB is 128-aligned, capped by tb_max and by the VMEM budget (the [TB,S] tile
    lane-pads to [TB,128] in VMEM), >= 2 tiles whenever possible (v7x megacore),
    and chosen near B_pad/num_tiles to minimize over-padding.
    """
    x_cols = _round_up(S, _LANE)                       # x-tile lanes after padding
    bytes_per_col = (2 * x_cols * 4                    # double-buffered x tile
                     + _round_up(H, _SUBLANE) * 4      # [H, TB] f32 hidden
                     + 2 * _SUBLANE * 4)               # double-buffered (1, TB) out
    tb_budget = max(_LANE, (vmem_tile_budget // bytes_per_col) // _LANE * _LANE)
    tb_cap = min(_round_up(max(tb_max, _LANE), _LANE), tb_budget)

    B_pad = _round_up(B, _LANE)
    min_tiles = 2 if B_pad >= 2 * _LANE else 1         # split across v7x TCs
    num_tiles = max(min_tiles, pl.cdiv(B_pad, tb_cap))
    TB = _round_up(pl.cdiv(B_pad, num_tiles), _LANE)   # near-even split, low padding
    num_tiles = pl.cdiv(B_pad, TB)
    B_pad = num_tiles * TB
    return TB, num_tiles, B_pad, bytes_per_col


def critic_forward(x, w1, b1, w2, b2, *, tb_max=16384,
                   vmem_tile_budget=20 * 1024 * 1024):
    """x: [B, state_dim] f32 -> [B, 1] f32 (same math as the torch Critic.forward)."""
    B, S = x.shape
    H = w1.shape[1]

    TB, num_tiles, B_pad, bytes_per_col = _pick_tiling(B, S, H, tb_max, vmem_tile_budget)

    # Explicit VMEM limit sized for this tile (v5e default scoped is only ~16 MiB),
    # with headroom but well under v7x's 64 MiB physical per TC.
    resident_bytes = 4 * (2 * _round_up(H, _SUBLANE) * _round_up(S, _LANE)
                          + 4 * _round_up(H, _SUBLANE) * _LANE)
    needed = TB * bytes_per_col + resident_bytes
    vmem_limit = int(min(max(needed + (4 << 20), 32 << 20), 56 << 20))

    # Pad x along batch only if needed (no extra HBM copy for aligned batches).
    x_in = x if B_pad == B else jnp.pad(x, ((0, B_pad - B), (0, 0)))

    w1t = w1.T                   # [H, S]  (tiny; negligible vs x traffic)
    b1c = b1.reshape(H, 1)
    w2c = w2.reshape(H, 1)
    b2s = b2.reshape(1, 1)

    out = pl.pallas_call(
        _critic_kernel,
        out_shape=jax.ShapeDtypeStruct((1, B_pad), jnp.float32),
        grid=(num_tiles,),
        in_specs=[
            pl.BlockSpec((TB, S), lambda i: (i, 0)),             # x tile (pipelined)
            pl.BlockSpec((H, S), lambda i: (0, 0)),              # W1ᵀ, resident
            pl.BlockSpec((H, 1), lambda i: (0, 0)),              # b1, resident
            pl.BlockSpec((H, 1), lambda i: (0, 0)),              # W2, resident
            pl.BlockSpec(memory_space=pltpu.MemorySpace.SMEM),   # b2 scalar
        ],
        out_specs=pl.BlockSpec((1, TB), lambda i: (0, i)),
        compiler_params=pltpu.CompilerParams(
            dimension_semantics=("parallel",),
            vmem_limit_bytes=vmem_limit,
        ),
    )(x_in, w1t, b1c, w2c, b2s)

    # Present the torch-style [B, 1] output (tiny copy; fold into the consumer
    # if the lane-dense [1, B] slab is acceptable downstream).
    return out[0, :B].reshape(B, 1)


def init_critic_params(key, state_dim, hidden_dim=32):
    """Deterministic init mimicking PyTorch nn.Linear default (U(-k, k), k=1/sqrt(fan_in))."""
    k1, k2, k3, k4 = jax.random.split(key, 4)
    bound1 = 1.0 / (state_dim ** 0.5)
    bound2 = 1.0 / (hidden_dim ** 0.5)
    w1 = jax.random.uniform(k1, (state_dim, hidden_dim), jnp.float32, -bound1, bound1)
    b1 = jax.random.uniform(k2, (hidden_dim,), jnp.float32, -bound1, bound1)
    w2 = jax.random.uniform(k3, (hidden_dim, 1), jnp.float32, -bound2, bound2)
    b2 = jax.random.uniform(k4, (1,), jnp.float32, -bound2, bound2)
    return w1, b1, w2, b2


def _ref_forward(x, w1, b1, w2, b2):
    return jnp.maximum(x @ w1 + b1[None, :], 0.0) @ w2 + b2[None, :]


if __name__ == "__main__":
    key = jax.random.PRNGKey(0)
    kx, kp = jax.random.split(key)

    batch, state_dim, hidden_dim = 8, 8, 32
    x = jax.random.normal(kx, (batch, state_dim), jnp.float32)
    w1, b1, w2, b2 = init_critic_params(kp, state_dim, hidden_dim)

    out = critic_forward(x, w1, b1, w2, b2)
    jax.block_until_ready(out)
    ref = _ref_forward(x, w1, b1, w2, b2)
    assert out.shape == (batch, 1)
    assert jnp.allclose(out, ref, atol=1e-5, rtol=1e-5)

    # Multi-tile + unaligned batch (exercises padding and the 3-step grid).
    xb = jax.random.normal(kx, (300, state_dim), jnp.float32)
    outb = critic_forward(xb, w1, b1, w2, b2, tb_max=128)
    jax.block_until_ready(outb)
    refb = _ref_forward(xb, w1, b1, w2, b2)
    assert outb.shape == (300, 1)
    assert jnp.allclose(outb, refb, atol=1e-5, rtol=1e-5)

    # Aligned batch: no wrapper-side padding copy, two parallel tiles (megacore path).
    xc = jax.random.normal(kx, (512, state_dim), jnp.float32)
    outc = critic_forward(xc, w1, b1, w2, b2)
    jax.block_until_ready(outc)
    refc = _ref_forward(xc, w1, b1, w2, b2)
    assert outc.shape == (512, 1)
    assert jnp.allclose(outc, refc, atol=1e-5, rtol=1e-5)

    print("KERNEL_OK")
</pallas_src>

<mosaic_0001>
module attributes {stable_mosaic.version = 11 : i64} {
  func.func @_critic_kernel(%arg0: i32, %arg1: memref<128x8xf32, #tpu.memory_space<vmem>>, %arg2: memref<32x8xf32, #tpu.memory_space<vmem>>, %arg3: memref<32x1xf32, #tpu.memory_space<vmem>>, %arg4: memref<32x1xf32, #tpu.memory_space<vmem>>, %arg5: memref<1x1xf32, #tpu.memory_space<smem>>, %arg6: memref<1x128xf32, #tpu.memory_space<vmem>>) attributes {dimension_semantics = [#tpu.dimension_semantics<parallel>], iteration_bounds = array<i64: 1>, scalar_prefetch = 0 : i64, scratch_operands = 0 : i64, tpu.core_type = #tpu.core_type<tc>, window_params = [{transform_indices = @transform_0, window_bounds = array<i64: 128, 8>}, {pipeline_mode = #tpu.pipeline_mode<synchronous>, transform_indices = @transform_1, window_bounds = array<i64: 32, 8>}, {pipeline_mode = #tpu.pipeline_mode<synchronous>, transform_indices = @transform_2, window_bounds = array<i64: 32, 1>}, {pipeline_mode = #tpu.pipeline_mode<synchronous>, transform_indices = @transform_3, window_bounds = array<i64: 32, 1>}, {transform_indices = @transform_4, window_bounds = array<i64: 1, 1>}, {transform_indices = @transform_5, window_bounds = array<i64: 1, 128>}]} {
    %c0 = arith.constant 0 : index
    %c0_0 = arith.constant 0 : index
    %0 = vector.load %arg2[%c0, %c0_0] : memref<32x8xf32, #tpu.memory_space<vmem>>, vector<32x8xf32>
    %c0_1 = arith.constant 0 : index
    %c0_2 = arith.constant 0 : index
    %1 = vector.load %arg1[%c0_1, %c0_2] : memref<128x8xf32, #tpu.memory_space<vmem>>, vector<128x8xf32>
    %cst = arith.constant dense<0.000000e+00> : vector<32x128xf32>
    %2 = tpu.matmul %0, %1, %cst {dimension_numbers = #tpu.dot_dimension_numbers<[1], [1], [0], [0], [0, 0, 1, 0], [], []>} : vector<32x8xf32>, vector<128x8xf32>, vector<32x128xf32> -> vector<32x128xf32>
    %c0_3 = arith.constant 0 : index
    %c0_4 = arith.constant 0 : index
    %3 = vector.load %arg3[%c0_3, %c0_4] : memref<32x1xf32, #tpu.memory_space<vmem>>, vector<32x1xf32>
    %4 = vector.broadcast %3 : vector<32x1xf32> to vector<32x128xf32>
    %5 = arith.addf %2, %4 : vector<32x128xf32>
    %cst_5 = arith.constant 0.000000e+00 : f32
    %6 = vector.broadcast %cst_5 : f32 to vector<32x128xf32>
    %7 = arith.maximumf %5, %6 : vector<32x128xf32>
    %c0_6 = arith.constant 0 : index
    %c0_7 = arith.constant 0 : index
    %8 = vector.load %arg4[%c0_6, %c0_7] : memref<32x1xf32, #tpu.memory_space<vmem>>, vector<32x1xf32>
    %9 = vector.broadcast %8 : vector<32x1xf32> to vector<32x128xf32>
    %10 = arith.mulf %7, %9 : vector<32x128xf32>
    %cst_8 = arith.constant dense<0.000000e+00> : vector<128xf32>
    %11 = vector.multi_reduction <add>, %10, %cst_8 [0] : vector<32x128xf32> to vector<128xf32>
    %12 = vector.shape_cast %11 : vector<128xf32> to vector<1x128xf32>
    %c0_9 = arith.constant 0 : index
    %c0_10 = arith.constant 0 : index
    %13 = memref.load %arg5[%c0_9, %c0_10] : memref<1x1xf32, #tpu.memory_space<smem>>
    %14 = vector.broadcast %13 : f32 to vector<1x128xf32>
    %15 = arith.addf %12, %14 : vector<1x128xf32>
    %c0_11 = arith.constant 0 : index
    %c0_12 = arith.constant 0 : index
    %16 = vector.load %arg6[%c0_11, %c0_12] : memref<1x128xf32, #tpu.memory_space<vmem>>, vector<1x128xf32>
    tpu.vector_store %arg6[%c0_11, %c0_12], %15 {strides = array<i32>} : memref<1x128xf32, #tpu.memory_space<vmem>>, vector<1x128xf32>,
    return
  }
  func.func @transform_0(%arg0: i32) -> (i32, i32) {
    %c0_i32 = arith.constant 0 : i32
    %c0_i32_0 = arith.constant 0 : i32
    return %arg0, %c0_i32 : i32, i32
  }
  func.func @transform_1(%arg0: i32) -> (i32, i32) {
    %c0_i32 = arith.constant 0 : i32
    %c0_i32_0 = arith.constant 0 : i32
    %c0_i32_1 = arith.constant 0 : i32
    return %c0_i32, %c0_i32_0 : i32, i32
  }
  func.func @transform_2(%arg0: i32) -> (i32, i32) {
    %c0_i32 = arith.constant 0 : i32
    %c0_i32_0 = arith.constant 0 : i32
    %c0_i32_1 = arith.constant 0 : i32
    return %c0_i32, %c0_i32_0 : i32, i32
  }
  func.func @transform_3(%arg0: i32) -> (i32, i32) {
    %c0_i32 = arith.constant 0 : i32
    %c0_i32_0 = arith.constant 0 : i32
    %c0_i32_1 = arith.constant 0 : i32
    return %c0_i32, %c0_i32_0 : i32, i32
  }
  func.func @transform_4(%arg0: i32) -> (i32, i32) {
    %c0_i32 = arith.constant 0 : i32
    %c0_i32_0 = arith.constant 0 : i32
    %c0_i32_1 = arith.constant 0 : i32
    return %c0_i32, %c0_i32_0 : i32, i32
  }
  func.func @transform_5(%arg0: i32) -> (i32, i32) {
    %c0_i32 = arith.constant 0 : i32
    %c0_i32_0 = arith.constant 0 : i32
    return %c0_i32, %arg0 : i32, i32
  }
}

</mosaic_0001>

<llo_original>
// kernel: tpu_custom_call.1
$region0: #{tpu_custom_call.1}
  #allocation0 [shape = 'u32[]', space=smem, size = 0x4, offset = 0x4, fixed_abs, tag = 'smem constant byte address 0x4 - core index']
  #allocation1 [shape = 'u32[72,128]{1,0:T(1,128)}', space=vmem, size = 0x9000, scoped, tag = 'internal scratch']
  #allocation2 [shape = 'f32[1,1]{1,0:T(1,128)S(6)}', space=smem, size = 0x200, scoped, tag = 'scoped memory for tpu_custom_call.1']
  %s0 = inlined_call_operand.vmem [shape: f32[128,8], index: 0, kind: input, shape index: {}]
  %s1 = inlined_call_operand.vmem [shape: f32[32,8], index: 1, kind: input, shape index: {}]
  %s2 = inlined_call_operand.vmem [shape: f32[32,1], index: 2, kind: input, shape index: {}]
  %s3 = inlined_call_operand.vmem [shape: f32[32,1], index: 3, kind: input, shape index: {}]
  %s4 = inlined_call_operand.<no memory space> [shape: f32[1,1], index: 4, kind: input, shape index: {}]
  %s5 = inlined_call_operand.hbm [shape: f32[1,128], index: 5, kind: output, shape index: {}]
  %s6 = sld [smem:[#allocation0]]
  $region30: #{tpu_custom_call.1} parent=0
    _
  %s8 = ssub.s32 1, %s6
  %s9 = scalar_select 0, %s8, %s6
  %10 = sst [smem:[#allocation2]] %s4
  $region1: #{tpu_custom_call.1} parent=0
    #allocation3 [shape = 'u8[512]{0}', space=vmem, size = 0x400, scoped, tag = 'output window, operand 0, single buffered']
    #allocation4 [shape = 's32[1]{0}', space=sflag, size = 0x4, scoped, tag = 'scoped memory for tpu_custom_call.1']
    %11 = vsyncpa [#allocation4], 0
    // Predicated region
    $region2: #{tpu_custom_call.1} parent=1 // pred_check
      _
    $region3: #{tpu_custom_call.1} parent=1 // pred_check_branch
      %13 = sbr.rel (0) target = $region5
    $region4: #{tpu_custom_call.1} parent=1 // pred_region
      _
    $region5: #{tpu_custom_call.1} parent=1 // pred_fallthru
      _
    // Predicated region
    $region6: #{tpu_custom_call.1} parent=1 // pred_check
      _
    $region7: #{tpu_custom_call.1} parent=1 // pred_check_branch
      %15 = sbr.rel (0) target = $region9
    $region8: #{tpu_custom_call.1} parent=1 // pred_region
      _
    $region9: #{tpu_custom_call.1} parent=1 // pred_fallthru
      _
    // Predicated region
    $region10: #{tpu_custom_call.1} parent=1 // pred_check
      _
    $region11: #{tpu_custom_call.1} parent=1 // pred_check_branch
      %17 = sbr.rel (0) target = $region13
    $region12: #{tpu_custom_call.1} parent=1 // pred_region
      _
    $region13: #{tpu_custom_call.1} parent=1 // pred_fallthru
      _
    // Predicated region
    $region14: #{tpu_custom_call.1} parent=1 // pred_check
      _
    $region15: #{tpu_custom_call.1} parent=1 // pred_check_branch
      %19 = sbr.rel (0) target = $region17
    $region16: #{tpu_custom_call.1} parent=1 // pred_region
      _
    $region17: #{tpu_custom_call.1} parent=1 // pred_fallthru
      _
    // Predicated region
    $region18: #{tpu_custom_call.1} parent=1 // pred_check
      _
    $region19: #{tpu_custom_call.1} parent=1 // pred_check_branch
      %21 = sbr.rel (0) target = $region21
    $region20: #{tpu_custom_call.1} parent=1 // pred_region
      _
    $region21: #{tpu_custom_call.1} parent=1 // pred_fallthru
      _
    %v22 = vld [vmem:[%s1] sm:$0xff]
    %v23 = vld [vmem:[%s1 + $0x8] sm:$0xff]
    %v24 = vld [vmem:[%s1 + $0x10] sm:$0xff]
    %v25 = vld [vmem:[%s1 + $0x18] sm:$0xff]
    %v26 = vld [vmem:[%s0] sm:$0xff]
    %v27 = vld [vmem:[%s0 + $0x8] sm:$0xff]
    %v28 = vld [vmem:[%s0 + $0x10] sm:$0xff]
    %v29 = vld [vmem:[%s0 + $0x18] sm:$0xff]
    %v30 = vld [vmem:[%s0 + $0x20] sm:$0xff]
    %v31 = vld [vmem:[%s0 + $0x28] sm:$0xff]
    %v32 = vld [vmem:[%s0 + $0x30] sm:$0xff]
    %v33 = vld [vmem:[%s0 + $0x38] sm:$0xff]
    %v34 = vld [vmem:[%s0 + $0x40] sm:$0xff]
    %v35 = vld [vmem:[%s0 + $0x48] sm:$0xff]
    %v36 = vld [vmem:[%s0 + $0x50] sm:$0xff]
    %v37 = vld [vmem:[%s0 + $0x58] sm:$0xff]
    %v38 = vld [vmem:[%s0 + $0x60] sm:$0xff]
    %v39 = vld [vmem:[%s0 + $0x68] sm:$0xff]
    %v40 = vld [vmem:[%s0 + $0x70] sm:$0xff]
    %v41 = vld [vmem:[%s0 + $0x78] sm:$0xff]
    %v42 = vld [vmem:[%s2] sm:$0xff]
    %v43 = vld [vmem:[%s2 + $0x8] sm:$0xff]
    %v44 = vld [vmem:[%s2 + $0x10] sm:$0xff]
    %v45 = vld [vmem:[%s2 + $0x18] sm:$0xff]
    %47 = vset.pattern.permute.xlu0 0
    %48 = vperm.xlu0 %47, %v42
    %v49 = vpop.permute.xlu0 %48
    %52 = vset.pattern.permute.xlu0 0
    %53 = vperm.xlu0 %52, %v43
    %v54 = vpop.permute.xlu0 %53
    %57 = vset.pattern.permute.xlu0 0
    %58 = vperm.xlu0 %57, %v44
    %v59 = vpop.permute.xlu0 %58
    %62 = vset.pattern.permute.xlu0 0
    %63 = vperm.xlu0 %62, %v45
    %v64 = vpop.permute.xlu0 %63
    %vm66 = vcmask 64512
    %v68 = vsel %vm66, %v22, 0
    %v71 = vsel %vm66, %v23, 0
    %v74 = vsel %vm66, %v24, 0
    %v77 = vsel %vm66, %v25, 0
    %v80 = vsel %vm66, %v26, 0
    %v83 = vsel %vm66, %v27, 0
    %v86 = vsel %vm66, %v28, 0
    %v89 = vsel %vm66, %v29, 0
    %v92 = vsel %vm66, %v30, 0
    %v95 = vsel %vm66, %v31, 0
    %v98 = vsel %vm66, %v32, 0
    %v101 = vsel %vm66, %v33, 0
    %v104 = vsel %vm66, %v34, 0
    %v107 = vsel %vm66, %v35, 0
    %v110 = vsel %vm66, %v36, 0
    %v113 = vsel %vm66, %v37, 0
    %v116 = vsel %vm66, %v38, 0
    %v119 = vsel %vm66, %v39, 0
    %v122 = vsel %vm66, %v40, 0
    %v125 = vsel %vm66, %v41, 0
    %127 = vmatpush.xpose.msra.mxu0 %v125
    %128 = vmatpush.xpose.msra.mxu0 %v122
    %129 = vmatpush.xpose.msra.mxu0 %v119
    %130 = vmatpush.xpose.msra.mxu0 %v116
    %131 = vmatpush.xpose.msra.mxu0 %v113
    %132 = vmatpush.xpose.msra.mxu0 %v110
    %133 = vmatpush.xpose.msra.mxu0 %v107
    %134 = vmatpush.xpose.msra.mxu0 %v104
    %135 = vmatpush.xpose.msra.mxu0 %v101
    %136 = vmatpush.xpose.msra.mxu0 %v98
    %137 = vmatpush.xpose.msra.mxu0 %v95
    %138 = vmatpush.xpose.msra.mxu0 %v92
    %139 = vmatpush.xpose.msra.mxu0 %v89
    %140 = vmatpush.xpose.msra.mxu0 %v86
    %141 = vmatpush.xpose.msra.mxu0 %v83
    %142 = vmatpush.xpose.msra.mxu0 %v80
    %143 = vmatmul.f32.gmra.mxu0 %v68
    %v144 = vpop.f32.mrf.mxu0
    %v145 = vadd.f32 %v49, %v144
    %146 = vmatmul.f32.gmra.mxu0 %v71
    %v147 = vpop.f32.mrf.mxu0
    %v148 = vadd.f32 %v54, %v147
    %149 = vmatmul.f32.gmra.mxu0 %v74
    %v150 = vpop.f32.mrf.mxu0
    %v151 = vadd.f32 %v59, %v150
    %152 = vmatmul.f32.gmra.mxu0 %v77
    %v153 = vpop.f32.mrf.mxu0
    %v154 = vadd.f32 %v64, %v153
    %155 = vdwg.mxu0
    %v156 = vmax.f32 %v145, 0.0
    %v157 = vmax.f32 %v148, 0.0
    %v158 = vmax.f32 %v151, 0.0
    %v159 = vmax.f32 %v154, 0.0
    %v160 = vld [vmem:[%s3] sm:$0xff]
    %v161 = vld [vmem:[%s3 + $0x8] sm:$0xff]
    %v162 = vld [vmem:[%s3 + $0x10] sm:$0xff]
    %v163 = vld [vmem:[%s3 + $0x18] sm:$0xff]
    %165 = vset.pattern.permute.xlu0 0
    %166 = vperm.xlu0 %165, %v160
    %v167 = vpop.permute.xlu0 %166
    %170 = vset.pattern.permute.xlu0 0
    %171 = vperm.xlu0 %170, %v161
    %v172 = vpop.permute.xlu0 %171
    %175 = vset.pattern.permute.xlu0 0
    %176 = vperm.xlu0 %175, %v162
    %v177 = vpop.permute.xlu0 %176
    %180 = vset.pattern.permute.xlu0 0
    %181 = vperm.xlu0 %180, %v163
    %v182 = vpop.permute.xlu0 %181
    %v184 = vmul.f32 %v156, %v167
    %v185 = vmul.f32 %v157, %v172
    %v186 = vmul.f32 %v158, %v177
    %v187 = vmul.f32 %v159, %v182
    %v188 = vadd.f32 %v184, %v185
    %v189 = vadd.f32 %v188, %v186
    %v190 = vadd.f32 %v189, %v187
    %v191 = vrot.slane %v190, 4
    %v192 = vadd.f32 %v190, %v191
    %v193 = vrot.slane %v192, 2
    %v194 = vadd.f32 %v192, %v193
    %v195 = vrot.slane %v194, 1
    %v196 = vadd.f32 %v194, %v195
    %s197 = sld [smem:[#allocation2]]
    %v198 = vstv %s197
    %v199 = vadd.f32 %v196, %v198
    %200 = vst [vmem:[#allocation3] sm:$0x1] %v199
    // Predicated region
    $region22: #{tpu_custom_call.1} parent=1 // pred_check
      _
    $region23: #{tpu_custom_call.1} parent=1 // pred_check_branch
      %202 = sbr.rel (0) target = $region25
    $region24: #{tpu_custom_call.1} parent=1 // pred_region
      %204 = vsyncadd [#allocation4], 0
      %s206 = sshll.u32 [#allocation3], 4
      %s207 = int_to_ptr.vmem [resolvable:$true] %s206
      %s208 = sshll.u32 %s5, 4
      %s209 = int_to_ptr.hbm [resolvable:$true] %s208
      %211 = dma.vmem_to_hbm [thread:$0]  %s207, 16, %s209, [#allocation4]
    $region25: #{tpu_custom_call.1} parent=1 // pred_fallthru
      _
    // Predicated region
    $region26: #{tpu_custom_call.1} parent=1 // pred_check
      _
    $region27: #{tpu_custom_call.1} parent=1 // pred_check_branch
      %213 = sbr.rel (0) target = $region29
    $region28: #{tpu_custom_call.1} parent=1 // pred_region
      %215 = dma.done [#allocation4], 16
    $region29: #{tpu_custom_call.1} parent=1 // pred_fallthru
      _
    %216 = vsyncpa [#allocation4], 1

</llo_original>
